<compile_context>
chip_gen: v6e
topology: v6e:2x2x1
jax: 0.10.0
libtpu: 0.0.40
codegen_flags: <defaults>
</compile_context>

<pallas_src>
import functools

import jax
import jax.numpy as jnp
import numpy as np
from jax.experimental import pallas as pl
from jax.experimental.pallas import tpu as pltpu


# ------------------------------------------------------------------ kernel

def _merge_kernel(x_ref, w_ref, b_ref, out_ref, *, hidden_size: int):
    """Fused Merge forward for one batch tile.

    x_ref   : (TB, E+2H)   activations (f32 or bf16)   VMEM
    w_ref   : (E+2H, 2H)   packed [W_merge | W_merge_g] (f32 or bf16), VMEM-resident
    b_ref   : (1, 2H)      packed [b_merge | b_merge_g] f32, VMEM-resident
    out_ref : (TB, H)      f32
    """
    H = hidden_size
    # Single MXU pass over the full K = E+2H contraction, f32 accumulation.
    gates = jnp.dot(x_ref[...], w_ref[...],
                    preferred_element_type=jnp.float32) + b_ref[...]       # (TB, 2H) f32

    sub_tree = jnp.tanh(gates[:, :H])            # contiguous column group -> EUP tanh
    sub_tree_g = jax.nn.sigmoid(gates[:, H:])    # contiguous column group -> EUP sigmoid
    out_ref[...] = (sub_tree * sub_tree_g).astype(out_ref.dtype)


# ------------------------------------------------------------------ param packing (ONCE)

def pack_merge_params(params, hidden_size, embedding_size, mxu_dtype=jnp.float32):
    """Pack both Linear layers into a single matmul operand. Call once at init.

    params: 'merge_w' (H, E+2H), 'merge_b' (H,), 'merge_g_w' (H, E+2H), 'merge_g_b' (H,)
            PyTorch nn.Linear layout; cat order = [node (E), sub_tree_1 (H), sub_tree_2 (H)].
    Returns dict with
      'w_packed' : (E+2H, 2H)   columns = [merge | merge_g], dtype = mxu_dtype
      'b_packed' : (1, 2H)      f32 (bias stays f32; added after the f32 accumulate)
    """
    del embedding_size  # layout already implied by merge_w's column order
    H = hidden_size
    w_packed = jnp.concatenate(
        [params["merge_w"].T, params["merge_g_w"].T], axis=1).astype(mxu_dtype)   # (E+2H, 2H)
    b_packed = jnp.concatenate(
        [params["merge_b"], params["merge_g_b"]]).reshape(1, 2 * H).astype(jnp.float32)
    return {"w_packed": w_packed, "b_packed": b_packed}


# ------------------------------------------------------------------ wrapper

def merge_forward(node_embedding, sub_tree_1, sub_tree_2, packed_params, hidden_size,
                  *, block_b=512, mxu_dtype=jnp.float32):
    """Eval-mode forward of Merge.

    node_embedding : (B, E)
    sub_tree_1/2   : (B, H)
    packed_params  : output of pack_merge_params (precomputed once)
    returns (B, H) f32
    """
    H = hidden_size
    B = node_embedding.shape[0]

    w = packed_params["w_packed"].astype(mxu_dtype)
    b = packed_params["b_packed"]                              # f32
    x = jnp.concatenate(
        [node_embedding, sub_tree_1, sub_tree_2], axis=1).astype(mxu_dtype)       # (B, E+2H)
    d_in = x.shape[1]

    # Batch tile: full batch for small B, otherwise 512-row tiles (8-sublane aligned).
    tb = B if B <= block_b else block_b
    grid = (pl.cdiv(B, tb),)

    elt = jnp.dtype(mxu_dtype).itemsize
    cost = pl.CostEstimate(
        flops=2 * B * d_in * 2 * H,
        transcendentals=2 * B * H,
        bytes_accessed=(B * d_in + d_in * 2 * H) * elt + 2 * H * 4 + B * H * 4,
    )

    return pl.pallas_call(
        functools.partial(_merge_kernel, hidden_size=H),
        out_shape=jax.ShapeDtypeStruct((B, H), jnp.float32),
        grid=grid,
        in_specs=[
            pl.BlockSpec((tb, d_in), lambda i: (i, 0)),        # activation tile (pipelined)
            pl.BlockSpec((d_in, 2 * H), lambda i: (0, 0)),     # packed weight, VMEM-resident
            pl.BlockSpec((1, 2 * H), lambda i: (0, 0)),        # packed bias, VMEM-resident
        ],
        out_specs=pl.BlockSpec((tb, H), lambda i: (i, 0)),
        compiler_params=pltpu.CompilerParams(
            dimension_semantics=("parallel",)),                # megacore batch sharding
        cost_estimate=cost,
    )(x, w, b)


# ------------------------------------------------------------------ raw params

def init_merge_params(key, hidden_size, embedding_size):
    """PyTorch nn.Linear init: U(-1/sqrt(fan_in), 1/sqrt(fan_in))."""
    fan_in = 2 * hidden_size + embedding_size
    bound = 1.0 / float(np.sqrt(fan_in))
    k1, k2, k3, k4 = jax.random.split(key, 4)
    return {
        "merge_w": jax.random.uniform(k1, (hidden_size, fan_in), jnp.float32, -bound, bound),
        "merge_b": jax.random.uniform(k2, (hidden_size,), jnp.float32, -bound, bound),
        "merge_g_w": jax.random.uniform(k3, (hidden_size, fan_in), jnp.float32, -bound, bound),
        "merge_g_b": jax.random.uniform(k4, (hidden_size,), jnp.float32, -bound, bound),
    }


# ------------------------------------------------------------------ pure-JAX reference

def merge_ref(node_embedding, sub_tree_1, sub_tree_2, params):
    cat = jnp.concatenate([node_embedding, sub_tree_1, sub_tree_2], axis=1)
    sub_tree = jnp.tanh(cat @ params["merge_w"].T + params["merge_b"])
    sub_tree_g = jax.nn.sigmoid(cat @ params["merge_g_w"].T + params["merge_g_b"])
    return sub_tree * sub_tree_g


# ------------------------------------------------------------------ main

if __name__ == "__main__":
    B, H, E = 2, 32, 32   # batch, hidden_size, embedding_size (small demo shapes)

    key = jax.random.PRNGKey(0)
    k_node, k_s1, k_s2, k_par = jax.random.split(key, 4)
    node_embedding = jax.random.normal(k_node, (B, E), jnp.float32)
    sub_tree_1 = jax.random.normal(k_s1, (B, H), jnp.float32)
    sub_tree_2 = jax.random.normal(k_s2, (B, H), jnp.float32)
    params = init_merge_params(k_par, H, E)

    ref = merge_ref(node_embedding, sub_tree_1, sub_tree_2, params)

    # f32 MXU path (exact parity with the reference).
    packed_f32 = pack_merge_params(params, H, E, mxu_dtype=jnp.float32)
    out = merge_forward(node_embedding, sub_tree_1, sub_tree_2, packed_f32, H,
                        mxu_dtype=jnp.float32)
    jax.block_until_ready(out)
    np.testing.assert_allclose(np.asarray(out), np.asarray(ref), rtol=2e-5, atol=2e-5)
    assert out.shape == (B, H)

    # bf16 MXU operands (v6e/v7x fast path): bf16 activations/weights, f32 accumulate
    # and f32 gating -> looser tolerance.
    packed_bf16 = pack_merge_params(params, H, E, mxu_dtype=jnp.bfloat16)
    out_bf16 = merge_forward(node_embedding, sub_tree_1, sub_tree_2, packed_bf16, H,
                             mxu_dtype=jnp.bfloat16)
    jax.block_until_ready(out_bf16)
    np.testing.assert_allclose(np.asarray(out_bf16), np.asarray(ref), rtol=3e-2, atol=3e-2)

    print("KERNEL_OK")
</pallas_src>

<mosaic_0001>
module attributes {stable_mosaic.version = 11 : i64} {
  func.func @_merge_kernel(%arg0: i32, %arg1: memref<2x96xf32, #tpu.memory_space<vmem>>, %arg2: memref<96x64xf32, #tpu.memory_space<vmem>>, %arg3: memref<1x64xf32, #tpu.memory_space<vmem>>, %arg4: memref<2x32xf32, #tpu.memory_space<vmem>>) attributes {dimension_semantics = [#tpu.dimension_semantics<parallel>], iteration_bounds = array<i64: 1>, scalar_prefetch = 0 : i64, scratch_operands = 0 : i64, tpu.core_type = #tpu.core_type<tc>, window_params = [{transform_indices = @transform_0, window_bounds = array<i64: 2, 96>}, {pipeline_mode = #tpu.pipeline_mode<synchronous>, transform_indices = @transform_1, window_bounds = array<i64: 96, 64>}, {pipeline_mode = #tpu.pipeline_mode<synchronous>, transform_indices = @transform_2, window_bounds = array<i64: 1, 64>}, {transform_indices = @transform_3, window_bounds = array<i64: 2, 32>}]} {
    %c0 = arith.constant 0 : index
    %c0_0 = arith.constant 0 : index
    %0 = vector.load %arg1[%c0, %c0_0] : memref<2x96xf32, #tpu.memory_space<vmem>>, vector<2x96xf32>
    %c0_1 = arith.constant 0 : index
    %c0_2 = arith.constant 0 : index
    %1 = vector.load %arg2[%c0_1, %c0_2] : memref<96x64xf32, #tpu.memory_space<vmem>>, vector<96x64xf32>
    %cst = arith.constant dense<0.000000e+00> : vector<2x64xf32>
    %2 = tpu.matmul %0, %1, %cst {dimension_numbers = #tpu.dot_dimension_numbers<[1], [0], [0], [1], [0, 0, 1, 1], [], []>} : vector<2x96xf32>, vector<96x64xf32>, vector<2x64xf32> -> vector<2x64xf32>
    %c0_3 = arith.constant 0 : index
    %c0_4 = arith.constant 0 : index
    %3 = vector.load %arg3[%c0_3, %c0_4] : memref<1x64xf32, #tpu.memory_space<vmem>>, vector<1x64xf32>
    %4 = vector.broadcast %3 : vector<1x64xf32> to vector<2x64xf32>
    %5 = arith.addf %2, %4 : vector<2x64xf32>
    %6 = vector.extract_strided_slice %5 {offsets = [0, 0], sizes = [2, 32], strides = [1, 1]} : vector<2x64xf32> to vector<2x32xf32>
    %7 = math.tanh %6 : vector<2x32xf32>
    %8 = vector.extract_strided_slice %5 {offsets = [0, 32], sizes = [2, 32], strides = [1, 1]} : vector<2x64xf32> to vector<2x32xf32>
    %9 = arith.negf %8 : vector<2x32xf32>
    %10 = math.exp %9 : vector<2x32xf32>
    %cst_5 = arith.constant 1.000000e+00 : f32
    %11 = vector.broadcast %cst_5 : f32 to vector<2x32xf32>
    %12 = arith.addf %11, %10 : vector<2x32xf32>
    %13 = arith.divf %11, %12 : vector<2x32xf32>
    %14 = arith.mulf %7, %13 : vector<2x32xf32>
    %c0_6 = arith.constant 0 : index
    %c0_7 = arith.constant 0 : index
    %15 = vector.load %arg4[%c0_6, %c0_7] : memref<2x32xf32, #tpu.memory_space<vmem>>, vector<2x32xf32>
    tpu.vector_store %arg4[%c0_6, %c0_7], %14 {strides = array<i32>} : memref<2x32xf32, #tpu.memory_space<vmem>>, vector<2x32xf32>,
    return
  }
  func.func @transform_0(%arg0: i32) -> (i32, i32) {
    %c0_i32 = arith.constant 0 : i32
    %c0_i32_0 = arith.constant 0 : i32
    return %arg0, %c0_i32 : i32, i32
  }
  func.func @transform_1(%arg0: i32) -> (i32, i32) {
    %c0_i32 = arith.constant 0 : i32
    %c0_i32_0 = arith.constant 0 : i32
    %c0_i32_1 = arith.constant 0 : i32
    return %c0_i32, %c0_i32_0 : i32, i32
  }
  func.func @transform_2(%arg0: i32) -> (i32, i32) {
    %c0_i32 = arith.constant 0 : i32
    %c0_i32_0 = arith.constant 0 : i32
    %c0_i32_1 = arith.constant 0 : i32
    return %c0_i32, %c0_i32_0 : i32, i32
  }
  func.func @transform_3(%arg0: i32) -> (i32, i32) {
    %c0_i32 = arith.constant 0 : i32
    %c0_i32_0 = arith.constant 0 : i32
    return %arg0, %c0_i32 : i32, i32
  }
}

</mosaic_0001>

<llo_original>
// kernel: tpu_custom_call.1
$region0: #{tpu_custom_call.1}
  #allocation0 [shape = 'u32[]', space=smem, size = 0x4, offset = 0x4, fixed_abs, tag = 'smem constant byte address 0x4 - core index']
  #allocation1 [shape = 'u32[144,128]{1,0:T(1,128)}', space=vmem, size = 0x12000, scoped, tag = 'internal scratch']
  %s0 = inlined_call_operand.vmem [shape: f32[2,96], index: 0, kind: input, shape index: {}]
  %s1 = inlined_call_operand.vmem [shape: f32[96,64], index: 1, kind: input, shape index: {}]
  %s2 = inlined_call_operand.vmem [shape: f32[1,64], index: 2, kind: input, shape index: {}]
  %s3 = inlined_call_operand.hbm [shape: f32[2,32], index: 3, kind: output, shape index: {}]
  %s4 = sld [smem:[#allocation0]]
  $region22: #{tpu_custom_call.1} parent=0
    _
  %s6 = ssub.s32 1, %s4
  %s7 = scalar_select 0, %s6, %s4
  $region1: #{tpu_custom_call.1} parent=0
    #allocation2 [shape = 'u8[1024]{0}', space=vmem, size = 0x400, scoped, tag = 'output window, operand 0, single buffered']
    #allocation3 [shape = 's32[1]{0}', space=sflag, size = 0x4, scoped, tag = 'scoped memory for tpu_custom_call.1']
    %8 = vsyncpa [#allocation3], 0
    // Predicated region
    $region2: #{tpu_custom_call.1} parent=1 // pred_check
      _
    $region3: #{tpu_custom_call.1} parent=1 // pred_check_branch
      %10 = sbr.rel (0) target = $region5
    $region4: #{tpu_custom_call.1} parent=1 // pred_region
      _
    $region5: #{tpu_custom_call.1} parent=1 // pred_fallthru
      _
    // Predicated region
    $region6: #{tpu_custom_call.1} parent=1 // pred_check
      _
    $region7: #{tpu_custom_call.1} parent=1 // pred_check_branch
      %12 = sbr.rel (0) target = $region9
    $region8: #{tpu_custom_call.1} parent=1 // pred_region
      _
    $region9: #{tpu_custom_call.1} parent=1 // pred_fallthru
      _
    // Predicated region
    $region10: #{tpu_custom_call.1} parent=1 // pred_check
      _
    $region11: #{tpu_custom_call.1} parent=1 // pred_check_branch
      %14 = sbr.rel (0) target = $region13
    $region12: #{tpu_custom_call.1} parent=1 // pred_region
      _
    $region13: #{tpu_custom_call.1} parent=1 // pred_fallthru
      _
    %v15 = vld [vmem:[%s0] sm:$0x3]
    %v16 = vld [vmem:[%s1] sm:$0xff]
    %v17 = vld [vmem:[%s1 + $0x8] sm:$0xff]
    %v18 = vld [vmem:[%s1 + $0x10] sm:$0xff]
    %v19 = vld [vmem:[%s1 + $0x18] sm:$0xff]
    %v20 = vld [vmem:[%s1 + $0x20] sm:$0xff]
    %v21 = vld [vmem:[%s1 + $0x28] sm:$0xff]
    %v22 = vld [vmem:[%s1 + $0x30] sm:$0xff]
    %v23 = vld [vmem:[%s1 + $0x38] sm:$0xff]
    %v24 = vld [vmem:[%s1 + $0x40] sm:$0xff]
    %v25 = vld [vmem:[%s1 + $0x48] sm:$0xff]
    %v26 = vld [vmem:[%s1 + $0x50] sm:$0xff]
    %v27 = vld [vmem:[%s1 + $0x58] sm:$0xff]
    %v28 = vld [vmem:[%s2] sm:$0x1]
    %v30 = vlaneseq
    %v31 = vshrl.u32 %v30, 7
    %v32 = vsub.s32 0, %v31
    %v33 = vrot.slane %v28, %v32
    %vm35 = vcmask 785408
    %v37 = vsel %vm35, %v15, 0
    %39 = vmatprep.subr.mxu0 0.0
    %40 = vmatpush1.msra.mxu0 0.0
    %41 = vmatprep.subr.mxu0 0.0
    %42 = vmatpush1.msra.mxu0 0.0
    %43 = vmatprep.subr.mxu0 0.0
    %44 = vmatpush1.msra.mxu0 0.0
    %45 = vmatprep.subr.mxu0 0.0
    %46 = vmatpush1.msra.mxu0 0.0
    %47 = vmatprep.subr.mxu0 0.0
    %48 = vmatpush1.msra.mxu0 %v27
    %49 = vmatprep.subr.mxu0 0.0
    %50 = vmatpush1.msra.mxu0 %v26
    %51 = vmatprep.subr.mxu0 0.0
    %52 = vmatpush1.msra.mxu0 %v25
    %53 = vmatprep.subr.mxu0 0.0
    %54 = vmatpush1.msra.mxu0 %v24
    %55 = vmatprep.subr.mxu0 0.0
    %56 = vmatpush1.msra.mxu0 %v23
    %57 = vmatprep.subr.mxu0 0.0
    %58 = vmatpush1.msra.mxu0 %v22
    %59 = vmatprep.subr.mxu0 0.0
    %60 = vmatpush1.msra.mxu0 %v21
    %61 = vmatprep.subr.mxu0 0.0
    %62 = vmatpush1.msra.mxu0 %v20
    %63 = vmatprep.subr.mxu0 0.0
    %64 = vmatpush1.msra.mxu0 %v19
    %65 = vmatprep.subr.mxu0 0.0
    %66 = vmatpush1.msra.mxu0 %v18
    %67 = vmatprep.subr.mxu0 0.0
    %68 = vmatpush1.msra.mxu0 %v17
    %69 = vmatprep.subr.mxu0 0.0
    %70 = vmatpush1.msra.mxu0 %v16
    %71 = vmatprep.subr.mxu0 0.0
    %72 = vmatpush2.msra.mxu0 0.0
    %73 = vmatprep.subr.mxu0 0.0
    %74 = vmatpush2.msra.mxu0 0.0
    %75 = vmatprep.subr.mxu0 0.0
    %76 = vmatpush2.msra.mxu0 0.0
    %77 = vmatprep.subr.mxu0 0.0
    %78 = vmatpush2.msra.mxu0 0.0
    %79 = vmatprep.subr.mxu0 0.0
    %80 = vmatpush2.msra.mxu0 0.0
    %81 = vmatprep.subr.mxu0 0.0
    %82 = vmatpush2.msra.mxu0 0.0
    %83 = vmatprep.subr.mxu0 0.0
    %84 = vmatpush2.msra.mxu0 0.0
    %85 = vmatprep.subr.mxu0 0.0
    %86 = vmatpush2.msra.mxu0 0.0
    %87 = vmatprep.subr.mxu0 0.0
    %88 = vmatpush2.msra.mxu0 0.0
    %89 = vmatprep.subr.mxu0 0.0
    %90 = vmatpush2.msra.mxu0 0.0
    %91 = vmatprep.subr.mxu0 0.0
    %92 = vmatpush2.msra.mxu0 0.0
    %93 = vmatprep.subr.mxu0 0.0
    %94 = vmatpush2.msra.mxu0 0.0
    %95 = vmatprep.subr.mxu0 0.0
    %96 = vmatpush2.msra.mxu0 0.0
    %97 = vmatprep.subr.mxu0 0.0
    %98 = vmatpush2.msra.mxu0 0.0
    %99 = vmatprep.subr.mxu0 0.0
    %100 = vmatpush2.msra.mxu0 0.0
    %101 = vmatprep.subr.mxu0 0.0
    %102 = vmatpush2.msra.mxu0 0.0
    %103 = vmatprep.mubr.f32.mxu0 0.0
    %104 = vmatmul.mubr.f32.gmra.mxu0 %v37
    %v105 = vpop.f32.mrf.mxu0
    %v106 = vadd.f32 %v33, %v105
    %v107 = vpop.f32.mrf.mxu0
    %108 = vdwg.mxu0
    %v109 = vtanh.pop %v106
    %v110 = vxor.u32 %v106, 2147483648
    %v111 = vmul.f32 %v110, 1.442695
    %v112 = vpow.pop %v111
    %v113 = vadd.f32 %v112, 1.0
    %v114 = vrcp.pop %v113
    %v115 = vmul.f32 1.0, %v114
    %117 = vrot.lane.b32.xlu0 %v115, 96
    %v118 = vpop.permute.xlu0 %117
    %v120 = vmul.f32 %v109, %v118
    %vm121 = vcmask 254976
    %122 = vst.msk [vmem:[#allocation2] sm:$0x3] %vm121, %v120
    // Predicated region
    $region14: #{tpu_custom_call.1} parent=1 // pred_check
      _
    $region15: #{tpu_custom_call.1} parent=1 // pred_check_branch
      %124 = sbr.rel (0) target = $region17
    $region16: #{tpu_custom_call.1} parent=1 // pred_region
      %s126 = ssub.s32 32, 32
      %127 = vsyncadd [#allocation3], %s126
      %s129 = sshll.u32 [#allocation2], 4
      %s130 = int_to_ptr.vmem [resolvable:$true] %s129
      %132 = dma.vmem_to_hbm [thread:$0]  %s130, 32, %s3, [#allocation3]
    $region17: #{tpu_custom_call.1} parent=1 // pred_fallthru
      _
    // Predicated region
    $region18: #{tpu_custom_call.1} parent=1 // pred_check
      _
    $region19: #{tpu_custom_call.1} parent=1 // pred_check_branch
      %134 = sbr.rel (0) target = $region21
    $region20: #{tpu_custom_call.1} parent=1 // pred_region
      %135 = dma.done [#allocation3], 32
    $region21: #{tpu_custom_call.1} parent=1 // pred_fallthru
      _
    %136 = vsyncpa [#allocation3], 1

</llo_original>
